<compile_context>
chip_gen: v7x
topology: tpu7x:2x2x1
jax: 0.10.0
libtpu: 0.0.40
codegen_flags: <defaults>
</compile_context>

<pallas_src>
import functools

import jax
import jax.numpy as jnp
from jax.experimental import pallas as pl
from jax.experimental.pallas import tpu as pltpu


def _backwarp_kernel(base_ref, sel_ref, img_ref, flow_ref, out_ref, *, C, H, W, TN):
    # base_ref : (2, TN)      [gx; gy] for this output tile (f32)
    # sel_ref  : (C, C*H)     grid-invariant channel-sum selector (f32, resident)
    # img_ref  : (1, C*H, W)  image in natural layout; row = (c, y), col = x (f32)
    # flow_ref : (1, 2, TN)   [u; v] for this tile (f32)
    # out_ref  : (1, C, TN)
    f = flow_ref[0]
    u = f[0:1, :]                                  # (1, TN)
    v = f[1:2, :]                                  # (1, TN)
    gx = base_ref[0:1, :]                          # (1, TN)
    gy = base_ref[1:2, :]                          # (1, TN)

    # PyTorch normalize -> grid_sample unnormalize (align_corners=False) == coord - 0.5.
    ix = gx + u - 0.5
    iy = gy + v - 0.5

    x0f = jnp.floor(ix)
    y0f = jnp.floor(iy)
    wx1 = ix - x0f
    wy1 = iy - y0f
    x0 = x0f.astype(jnp.int32)
    y0 = y0f.astype(jnp.int32)
    x1 = x0 + 1
    y1 = y0 + 1

    # Separable bilinear weights via one nested select per axis (x0 != x1, y0 != y1).
    # Out-of-range corner indices match no row, which implements zeros padding.
    xi = jax.lax.broadcasted_iota(jnp.int32, (W, TN), 0)
    Wx = jnp.where(xi == x0, 1.0 - wx1, jnp.where(xi == x1, wx1, 0.0))   # (W, TN)
    yi = jax.lax.broadcasted_iota(jnp.int32, (H, TN), 0)
    Wy = jnp.where(yi == y0, 1.0 - wy1, jnp.where(yi == y1, wy1, 0.0))   # (H, TN)

    img = img_ref[0]                                                     # (C*H, W)

    # x-contraction on the MXU: tmp[(c,y), p] = sum_x img[c, y, x] * Wx[x, p]
    tmp = jnp.dot(img, Wx, preferred_element_type=jnp.float32)           # (C*H, TN)

    # Row weights applied as a broadcast multiply (no concatenate / materialized copies).
    weighted = (tmp.reshape(C, H, TN) * Wy[None, :, :]).reshape(C * H, TN)

    # Per-channel sum over y via the tiny resident selector matmul (MXU; no XLU reduce).
    out = jnp.dot(sel_ref[...], weighted, preferred_element_type=jnp.float32)  # (C, TN)
    out_ref[0] = out.astype(out_ref.dtype)


def _footprint_bytes(C, H, W, TN, out_itemsize, img_bufs):
    """Rough VMEM footprint for one grid step (bytes)."""
    img_blk = 4 * C * H * W * img_bufs                  # resident f32 image block(s)
    sel_blk = 4 * C * (C * H) * 2                       # selector (tiny, double-buffered)
    tile_io = 2 * (4 * 2 * TN + 4 * 2 * TN + out_itemsize * C * TN)  # base, flow, out
    temps = 4 * (W * TN + H * TN + 2 * C * H * TN)      # Wx, Wy, tmp, weighted
    return img_blk + sel_blk + tile_io + temps


def backwarp_grid_sample(img, flow):
    """img: (B, C, H, W), flow: (B, 2, H, W) -> (B, C, H, W)."""
    B, C, H, W = img.shape
    assert flow.shape == (B, 2, H, W)
    out_dtype = img.dtype
    if img.dtype != jnp.float32:
        # Upcast once in the wrapper (never per-tile inside the kernel).
        img = img.astype(jnp.float32)
    HW = H * W

    try:
        vmem_cap = int(pltpu.get_tpu_info().vmem_capacity_bytes)
    except Exception:
        vmem_cap = 64 * 2**20   # conservative (v7x per-TC)

    o_sz = jnp.dtype(out_dtype).itemsize
    hw128 = -(-HW // 128) * 128
    budget = int(0.6 * vmem_cap)

    # Single-buffer the (j-invariant) resident image block only when double-buffering
    # it would squeeze VMEM (v7x-sized images).
    img_bufs = 2
    if _footprint_bytes(C, H, W, min(256, hw128), o_sz, 2) > budget:
        img_bufs = 1

    # Largest lane-dense tile that fits the VMEM budget (multiples of 256 preferred).
    TN = 128
    for cand in (1024, 512, 256):
        if cand <= hw128 and _footprint_bytes(C, H, W, cand, o_sz, img_bufs) <= budget:
            TN = cand
            break
    HW_pad = -(-HW // TN) * TN
    num_tiles = HW_pad // TN

    vmem_limit = int(min(vmem_cap,
                         max(int(1.5 * _footprint_bytes(C, H, W, TN, o_sz, img_bufs)),
                             32 * 2**20)))

    # Layout plumbing (pure relayout, no transpose, no compute hoisting).
    img_chw = img.reshape(B, C * H, W)                      # natural layout, free reshape
    flow_flat = flow.astype(jnp.float32).reshape(B, 2, HW)
    if HW_pad != HW:
        flow_flat = jnp.pad(flow_flat, ((0, 0), (0, 0), (0, HW_pad - HW)))

    # Flow-independent base grid (computed once).
    p = jnp.arange(HW_pad, dtype=jnp.int32)
    base = jnp.stack([(p % W).astype(jnp.float32),
                      (p // W).astype(jnp.float32)], axis=0)            # (2, HW_pad)

    # Grid-invariant channel-sum selector, hoisted out of the kernel.
    ci = jnp.arange(C, dtype=jnp.int32)[:, None]
    ri = jnp.arange(C * H, dtype=jnp.int32)[None, :]
    sel = ((ri >= ci * H) & (ri < (ci + 1) * H)).astype(jnp.float32)    # (C, C*H)

    img_spec_kwargs = {}
    if img_bufs == 1:
        img_spec_kwargs["pipeline_mode"] = pl.Buffered(1)

    kernel = functools.partial(_backwarp_kernel, C=C, H=H, W=W, TN=TN)
    out_flat = pl.pallas_call(
        kernel,
        out_shape=jax.ShapeDtypeStruct((B, C, HW_pad), out_dtype),
        grid_spec=pltpu.PrefetchScalarGridSpec(
            num_scalar_prefetch=0,
            grid=(B, num_tiles),
            in_specs=[
                pl.BlockSpec((2, TN), lambda b, j: (0, j)),           # base grid tile
                pl.BlockSpec((C, C * H), lambda b, j: (0, 0)),        # selector (resident)
                pl.BlockSpec((1, C * H, W), lambda b, j: (b, 0, 0),   # full image per batch
                             **img_spec_kwargs),
                pl.BlockSpec((1, 2, TN), lambda b, j: (b, 0, j)),     # flow tile
            ],
            out_specs=pl.BlockSpec((1, C, TN), lambda b, j: (b, 0, j)),
        ),
        compiler_params=pltpu.CompilerParams(
            dimension_semantics=("parallel", "parallel"),
            vmem_limit_bytes=vmem_limit),
    )(base, sel, img_chw, flow_flat)
    return out_flat[:, :, :HW].reshape(B, C, H, W)


def backwarp_reference(img, flow):
    """Independent pure-JAX reference (explicit bilinear gather, full PyTorch
    normalize -> grid_sample unnormalize round trip)."""
    B, C, H, W = img.shape
    gy, gx = jnp.meshgrid(jnp.arange(H, dtype=jnp.float32),
                          jnp.arange(W, dtype=jnp.float32), indexing="ij")
    x = gx[None] + flow[:, 0]
    y = gy[None] + flow[:, 1]
    xn = 2.0 * x / W - 1.0
    yn = 2.0 * y / H - 1.0
    ix = ((xn + 1.0) * W - 1.0) * 0.5
    iy = ((yn + 1.0) * H - 1.0) * 0.5
    x0 = jnp.floor(ix); x1 = x0 + 1.0
    y0 = jnp.floor(iy); y1 = y0 + 1.0
    wx1 = ix - x0; wx0 = 1.0 - wx1
    wy1 = iy - y0; wy0 = 1.0 - wy1
    flat = img.reshape(B, C, H * W)

    def gather(xc, yc):
        inb = ((xc >= 0) & (xc < W) & (yc >= 0) & (yc < H)).astype(img.dtype)
        xcc = jnp.clip(xc, 0, W - 1).astype(jnp.int32)
        ycc = jnp.clip(yc, 0, H - 1).astype(jnp.int32)
        idx = (ycc * W + xcc).reshape(B, H * W)
        vals = jax.vmap(lambda f, i: jnp.take(f, i, axis=1))(flat, idx)
        return vals.reshape(B, C, H, W) * inb[:, None]

    return (gather(x0, y0) * (wx0 * wy0)[:, None]
            + gather(x1, y0) * (wx1 * wy0)[:, None]
            + gather(x0, y1) * (wx0 * wy1)[:, None]
            + gather(x1, y1) * (wx1 * wy1)[:, None])


if __name__ == "__main__":
    B, C, H, W = 2, 4, 16, 16
    key = jax.random.PRNGKey(0)
    k_img, k_flow = jax.random.split(key)
    img = jax.random.normal(k_img, (B, C, H, W), dtype=jnp.float32)
    flow = 2.0 * jax.random.normal(k_flow, (B, 2, H, W), dtype=jnp.float32)

    out = jax.block_until_ready(backwarp_grid_sample(img, flow))

    ref = backwarp_reference(img, flow)
    assert out.shape == (B, C, H, W)
    assert jnp.allclose(out, ref, atol=1e-4, rtol=1e-4), "mismatch vs reference"

    print("KERNEL_OK")
</pallas_src>

<mosaic_0001>
module attributes {stable_mosaic.version = 11 : i64} {
  func.func @_backwarp_kernel(%arg0: i32, %arg1: i32, %arg2: memref<2x256xf32, #tpu.memory_space<vmem>>, %arg3: memref<4x64xf32, #tpu.memory_space<vmem>>, %arg4: memref<1x64x16xf32, #tpu.memory_space<vmem>>, %arg5: memref<1x2x256xf32, #tpu.memory_space<vmem>>, %arg6: memref<1x4x256xf32, #tpu.memory_space<vmem>>) attributes {dimension_semantics = [#tpu.dimension_semantics<parallel>, #tpu.dimension_semantics<parallel>], iteration_bounds = array<i64: 2, 1>, scalar_prefetch = 0 : i64, scratch_operands = 0 : i64, tpu.core_type = #tpu.core_type<tc>, window_params = [{transform_indices = @transform_0, window_bounds = array<i64: 2, 256>}, {pipeline_mode = #tpu.pipeline_mode<synchronous>, transform_indices = @transform_1, window_bounds = array<i64: 4, 64>}, {transform_indices = @transform_2, window_bounds = array<i64: 1, 64, 16>}, {transform_indices = @transform_3, window_bounds = array<i64: 1, 2, 256>}, {transform_indices = @transform_4, window_bounds = array<i64: 1, 4, 256>}]} {
    %c0 = arith.constant 0 : index
    %c0_0 = arith.constant 0 : index
    %c0_1 = arith.constant 0 : index
    %0 = vector.load %arg5[%c0, %c0_0, %c0_1] : memref<1x2x256xf32, #tpu.memory_space<vmem>>, vector<1x2x256xf32>
    %1 = vector.shape_cast %0 : vector<1x2x256xf32> to vector<2x256xf32>
    %2 = vector.extract_strided_slice %1 {offsets = [0, 0], sizes = [1, 256], strides = [1, 1]} : vector<2x256xf32> to vector<1x256xf32>
    %3 = vector.extract_strided_slice %1 {offsets = [1, 0], sizes = [1, 256], strides = [1, 1]} : vector<2x256xf32> to vector<1x256xf32>
    %c0_2 = arith.constant 0 : index
    %c0_3 = arith.constant 0 : index
    %4 = vector.load %arg2[%c0_2, %c0_3] : memref<2x256xf32, #tpu.memory_space<vmem>>, vector<1x256xf32>
    %c1 = arith.constant 1 : index
    %c0_4 = arith.constant 0 : index
    %5 = vector.load %arg2[%c1, %c0_4] : memref<2x256xf32, #tpu.memory_space<vmem>>, vector<1x256xf32>
    %6 = arith.addf %4, %2 : vector<1x256xf32>
    %cst = arith.constant 5.000000e-01 : f32
    %7 = vector.broadcast %cst : f32 to vector<1x256xf32>
    %8 = arith.subf %6, %7 : vector<1x256xf32>
    %9 = arith.addf %5, %3 : vector<1x256xf32>
    %cst_5 = arith.constant 5.000000e-01 : f32
    %10 = vector.broadcast %cst_5 : f32 to vector<1x256xf32>
    %11 = arith.subf %9, %10 : vector<1x256xf32>
    %12 = math.floor %8 : vector<1x256xf32>
    %13 = math.floor %11 : vector<1x256xf32>
    %14 = arith.subf %8, %12 : vector<1x256xf32>
    %15 = arith.subf %11, %13 : vector<1x256xf32>
    %16 = arith.fptosi %12 : vector<1x256xf32> to vector<1x256xi32>
    %17 = arith.fptosi %13 : vector<1x256xf32> to vector<1x256xi32>
    %c1_i32 = arith.constant 1 : i32
    %18 = vector.broadcast %c1_i32 : i32 to vector<1x256xi32>
    %19 = arith.addi %16, %18 : vector<1x256xi32>
    %c1_i32_6 = arith.constant 1 : i32
    %20 = vector.broadcast %c1_i32_6 : i32 to vector<1x256xi32>
    %21 = arith.addi %17, %20 : vector<1x256xi32>
    %22 = tpu.iota {dimensions = array<i32: 0>} : vector<16x256xi32>
    %23 = vector.broadcast %16 : vector<1x256xi32> to vector<16x256xi32>
    %24 = arith.cmpi eq, %22, %23 : vector<16x256xi32>
    %cst_7 = arith.constant 1.000000e+00 : f32
    %25 = vector.broadcast %cst_7 : f32 to vector<1x256xf32>
    %26 = arith.subf %25, %14 : vector<1x256xf32>
    %27 = vector.broadcast %19 : vector<1x256xi32> to vector<16x256xi32>
    %28 = arith.cmpi eq, %22, %27 : vector<16x256xi32>
    %cst_8 = arith.constant 0.000000e+00 : f32
    %29 = vector.shape_cast %14 : vector<1x256xf32> to vector<1x256xf32>
    %30 = vector.broadcast %29 : vector<1x256xf32> to vector<16x256xf32>
    %31 = vector.broadcast %cst_8 : f32 to vector<16x256xf32>
    %32 = arith.select %28, %30, %31 : vector<16x256xi1>, vector<16x256xf32>
    %33 = vector.shape_cast %26 : vector<1x256xf32> to vector<1x256xf32>
    %34 = vector.broadcast %33 : vector<1x256xf32> to vector<16x256xf32>
    %35 = arith.select %24, %34, %32 : vector<16x256xi1>, vector<16x256xf32>
    %36 = tpu.iota {dimensions = array<i32: 0>} : vector<16x256xi32>
    %37 = vector.broadcast %17 : vector<1x256xi32> to vector<16x256xi32>
    %38 = arith.cmpi eq, %36, %37 : vector<16x256xi32>
    %cst_9 = arith.constant 1.000000e+00 : f32
    %39 = vector.broadcast %cst_9 : f32 to vector<1x256xf32>
    %40 = arith.subf %39, %15 : vector<1x256xf32>
    %41 = vector.broadcast %21 : vector<1x256xi32> to vector<16x256xi32>
    %42 = arith.cmpi eq, %36, %41 : vector<16x256xi32>
    %cst_10 = arith.constant 0.000000e+00 : f32
    %43 = vector.shape_cast %15 : vector<1x256xf32> to vector<1x256xf32>
    %44 = vector.broadcast %43 : vector<1x256xf32> to vector<16x256xf32>
    %45 = vector.broadcast %cst_10 : f32 to vector<16x256xf32>
    %46 = arith.select %42, %44, %45 : vector<16x256xi1>, vector<16x256xf32>
    %47 = vector.shape_cast %40 : vector<1x256xf32> to vector<1x256xf32>
    %48 = vector.broadcast %47 : vector<1x256xf32> to vector<16x256xf32>
    %49 = arith.select %38, %48, %46 : vector<16x256xi1>, vector<16x256xf32>
    %c0_11 = arith.constant 0 : index
    %c0_12 = arith.constant 0 : index
    %c0_13 = arith.constant 0 : index
    %50 = vector.load %arg4[%c0_11, %c0_12, %c0_13] : memref<1x64x16xf32, #tpu.memory_space<vmem>>, vector<1x64x16xf32>
    %51 = vector.shape_cast %50 : vector<1x64x16xf32> to vector<64x16xf32>
    %cst_14 = arith.constant dense<0.000000e+00> : vector<64x256xf32>
    %52 = tpu.matmul %51, %35, %cst_14 {dimension_numbers = #tpu.dot_dimension_numbers<[1], [0], [0], [1], [0, 0, 1, 1], [], []>} : vector<64x16xf32>, vector<16x256xf32>, vector<64x256xf32> -> vector<64x256xf32>
    %53 = vector.shape_cast %52 : vector<64x256xf32> to vector<4x16x256xf32>
    %54 = vector.shape_cast %49 : vector<16x256xf32> to vector<1x16x256xf32>
    %55 = vector.broadcast %54 : vector<1x16x256xf32> to vector<4x16x256xf32>
    %56 = arith.mulf %53, %55 : vector<4x16x256xf32>
    %57 = vector.shape_cast %56 : vector<4x16x256xf32> to vector<64x256xf32>
    %c0_15 = arith.constant 0 : index
    %c0_16 = arith.constant 0 : index
    %58 = vector.load %arg3[%c0_15, %c0_16] : memref<4x64xf32, #tpu.memory_space<vmem>>, vector<4x64xf32>
    %cst_17 = arith.constant dense<0.000000e+00> : vector<4x256xf32>
    %59 = tpu.matmul %58, %57, %cst_17 {dimension_numbers = #tpu.dot_dimension_numbers<[1], [0], [0], [1], [0, 0, 1, 1], [], []>} : vector<4x64xf32>, vector<64x256xf32>, vector<4x256xf32> -> vector<4x256xf32>
    %c0_18 = arith.constant 0 : index
    %c0_19 = arith.constant 0 : index
    %c0_20 = arith.constant 0 : index
    %60 = vector.load %arg6[%c0_18, %c0_19, %c0_20] : memref<1x4x256xf32, #tpu.memory_space<vmem>>, vector<1x4x256xf32>
    %61 = vector.shape_cast %60 : vector<1x4x256xf32> to vector<4x256xf32>
    %62 = vector.shape_cast %59 : vector<4x256xf32> to vector<1x4x256xf32>
    tpu.vector_store %arg6[%c0_18, %c0_19, %c0_20], %62 {strides = array<i32>} : memref<1x4x256xf32, #tpu.memory_space<vmem>>, vector<1x4x256xf32>,
    return
  }
  func.func @transform_0(%arg0: i32, %arg1: i32) -> (i32, i32) {
    %c0_i32 = arith.constant 0 : i32
    %c0_i32_0 = arith.constant 0 : i32
    return %c0_i32, %arg1 : i32, i32
  }
  func.func @transform_1(%arg0: i32, %arg1: i32) -> (i32, i32) {
    %c0_i32 = arith.constant 0 : i32
    %c0_i32_0 = arith.constant 0 : i32
    %c0_i32_1 = arith.constant 0 : i32
    return %c0_i32, %c0_i32_0 : i32, i32
  }
  func.func @transform_2(%arg0: i32, %arg1: i32) -> (i32, i32, i32) {
    %c0_i32 = arith.constant 0 : i32
    %c0_i32_0 = arith.constant 0 : i32
    %c0_i32_1 = arith.constant 0 : i32
    return %arg0, %c0_i32, %c0_i32_0 : i32, i32, i32
  }
  func.func @transform_3(%arg0: i32, %arg1: i32) -> (i32, i32, i32) {
    %c0_i32 = arith.constant 0 : i32
    %c0_i32_0 = arith.constant 0 : i32
    return %arg0, %c0_i32, %arg1 : i32, i32, i32
  }
  func.func @transform_4(%arg0: i32, %arg1: i32) -> (i32, i32, i32) {
    %c0_i32 = arith.constant 0 : i32
    %c0_i32_0 = arith.constant 0 : i32
    return %arg0, %c0_i32, %arg1 : i32, i32, i32
  }
}

</mosaic_0001>

<llo_original>
// kernel: tpu_custom_call.1
$region0: #{tpu_custom_call.1}
  #allocation0 [shape = 'u32[]', space=smem, size = 0x4, offset = 0x4, fixed_abs, tag = 'smem constant byte address 0x4 - core index']
  #allocation1 [shape = 'u32[144,128]{1,0:T(1,128)}', space=vmem, size = 0x12000, scoped, tag = 'internal scratch']
  %s0 = inlined_call_operand.vmem [shape: f32[2,256], index: 0, kind: input, shape index: {}]
  %s1 = inlined_call_operand.vmem [shape: f32[4,64], index: 1, kind: input, shape index: {}]
  %s2 = inlined_call_operand.vmem [shape: f32[2,64,16], index: 2, kind: input, shape index: {}]
  %s3 = inlined_call_operand.vmem [shape: f32[2,2,256], index: 3, kind: input, shape index: {}]
  %s4 = inlined_call_operand.hbm [shape: f32[2,4,256], index: 4, kind: output, shape index: {}]
  %s5 = sld [smem:[#allocation0]]
  $region49: #{tpu_custom_call.1} parent=0
    _
  %s7 = ssub.s32 1, %s5
  %s8 = scalar_select 0, %s7, %s5
  $region1: #{tpu_custom_call.1} parent=0
    #allocation2 [shape = 'u8[8192]{0}', space=vmem, size = 0x2000, scoped, tag = 'output window, operand 0']
    #allocation3 [shape = 's32[2]{0}', space=sflag, size = 0x8, scoped, tag = 'scoped memory for tpu_custom_call.1']
    %9 = vsyncpa [#allocation3], 0
    %s10 = scalar_lea.sflag [#allocation3], 1
    %11 = vsyncpa %s10, 0
    loop: start=0, step=1, limit=4
    $region2: #{tpu_custom_call.1} parent=1 // loop_pre_header
      _
    $region3: #{tpu_custom_call.1} parent=1 // loop_header
      %s13 = sphi 0, %s17
      %p14 = scmp.ge.s32.totalorder %s13, 4
      %s20 = sphi 0, %s32
      %s21 = sphi 0, %s28
      %s22 = sphi 0, %s20
      %s23 = sphi 0, %s21
      %s24 = sphi 0, %s22
      %s25 = sphi 0, %s23
      %s35 = sphi 0, %s37
      %s38 = sphi 0, %s35
      %s39 = sphi 0, %s38
      %s55 = sphi 0, %s39
      %s59 = sphi 0, %s59
      %s61 = sphi 0, %s59
      %s62 = sphi 0, %s61
      %s76 = sphi 0, %s62
      %s82 = sphi 0, %s84
      %s85 = sphi 0, %s82
      %s86 = sphi 0, %s85
      %s102 = sphi 0, %s86
      %s110 = sphi 0, %s112
      %s113 = sphi 0, %s110
      %s114 = sphi 0, %s113
      %s130 = sphi 0, %s114
      %s138 = sphi 0, %s140
      %s141 = sphi 0, %s138
      %s142 = sphi 0, %s141
      %s158 = sphi 0, %s142
    $region4: #{tpu_custom_call.1} parent=1 // loop_header_branch
      %16 = sbr.rel (%p14) target = $region8
    $region5: #{tpu_custom_call.1} parent=1 // loop_body
      %s18 = ssub.s32 %s13, 1
      %s19 = ssub.s32 %s13, 2
      %s26 = sadd.s32 1, %s21
      %p27 = scmp.ge.s32.totalorder %s26, 1
      %s28 = scalar_select %p27, 0, %s26
      %s29 = sadd.s32 1, %s20
      %s30 = scalar_select %p27, %s29, %s20
      %p31 = scmp.ge.s32.totalorder %s30, 2
      %s32 = scalar_select %p31, 0, %s30
      %s33 = ssub.s32 %s21, %s28
      %p34 = scmp.eq.s32.totalorder %s33, 0
      %s36 = sadd.s32 %s35, 1
      %s37 = scalar_select %p34, %s35, %s36
      %p40 = pneg %p34
      %p41 = scmp.eq.s32.totalorder %s13, 1
      %p42 = por %p40, %p41
      %p43 = scmp.ne.s32.totalorder %s35, %s38
      %p44 = scmp.eq.s32.totalorder %s13, 0
      %p45 = por %p43, %p44
      %p46 = scmp.ne.s32.totalorder %s35, %s38
      %p47 = scmp.eq.s32.totalorder %s18, 1
      %p48 = por %p46, %p47
      %p49 = scmp.ne.s32.totalorder %s38, %s39
      %p50 = scmp.eq.s32.totalorder %s18, 0
      %p51 = por %p49, %p50
      %p52 = scmp.ne.s32.totalorder %s38, %s39
      %p53 = scmp.eq.s32.totalorder %s19, 1
      %p54 = por %p52, %p53
      %p56 = scmp.ne.s32.totalorder %s39, %s55
      %p57 = scmp.eq.s32.totalorder %s19, 0
      %p58 = por %p56, %p57
      %s60 = sadd.s32 %s59, 1
      %p63 = scmp.eq.s32.totalorder %s13, 1
      %p64 = scmp.ne.s32.totalorder %s59, %s61
      %p65 = scmp.eq.s32.totalorder %s13, 0
      %p66 = por %p64, %p65
      %p67 = scmp.ne.s32.totalorder %s59, %s61
      %p68 = scmp.eq.s32.totalorder %s18, 1
      %p69 = por %p67, %p68
      %p70 = scmp.ne.s32.totalorder %s61, %s62
      %p71 = scmp.eq.s32.totalorder %s18, 0
      %p72 = por %p70, %p71
      %p73 = scmp.ne.s32.totalorder %s61, %s62
      %p74 = scmp.eq.s32.totalorder %s19, 1
      %p75 = por %p73, %p74
      %p77 = scmp.ne.s32.totalorder %s62, %s76
      %p78 = scmp.eq.s32.totalorder %s19, 0
      %p79 = por %p77, %p78
      %s80 = ssub.s32 %s20, %s32
      %p81 = scmp.eq.s32.totalorder %s80, 0
      %s83 = sadd.s32 %s82, 1
      %s84 = scalar_select %p81, %s82, %s83
      %p87 = pneg %p81
      %p88 = scmp.eq.s32.totalorder %s13, 1
      %p89 = por %p87, %p88
      %p90 = scmp.ne.s32.totalorder %s82, %s85
      %p91 = scmp.eq.s32.totalorder %s13, 0
      %p92 = por %p90, %p91
      %p93 = scmp.ne.s32.totalorder %s82, %s85
      %p94 = scmp.eq.s32.totalorder %s18, 1
      %p95 = por %p93, %p94
      %p96 = scmp.ne.s32.totalorder %s85, %s86
      %p97 = scmp.eq.s32.totalorder %s18, 0
      %p98 = por %p96, %p97
      %p99 = scmp.ne.s32.totalorder %s85, %s86
      %p100 = scmp.eq.s32.totalorder %s19, 1
      %p101 = por %p99, %p100
      %p103 = scmp.ne.s32.totalorder %s86, %s102
      %p104 = scmp.eq.s32.totalorder %s19, 0
      %p105 = por %p103, %p104
      %s106 = ssub.s32 %s20, %s32
      %s107 = ssub.s32 %s21, %s28
      %s108 = sor.u32 %s106, %s107
      %p109 = scmp.eq.s32.totalorder %s108, 0
      %s111 = sadd.s32 %s110, 1
      %s112 = scalar_select %p109, %s110, %s111
      %p115 = pneg %p109
      %p116 = scmp.eq.s32.totalorder %s13, 1
      %p117 = por %p115, %p116
      %p118 = scmp.ne.s32.totalorder %s110, %s113
      %p119 = scmp.eq.s32.totalorder %s13, 0
      %p120 = por %p118, %p119
      %p121 = scmp.ne.s32.totalorder %s110, %s113
      %p122 = scmp.eq.s32.totalorder %s18, 1
      %p123 = por %p121, %p122
      %p124 = scmp.ne.s32.totalorder %s113, %s114
      %p125 = scmp.eq.s32.totalorder %s18, 0
      %p126 = por %p124, %p125
      %p127 = scmp.ne.s32.totalorder %s113, %s114
      %p128 = scmp.eq.s32.totalorder %s19, 1
      %p129 = por %p127, %p128
      %p131 = scmp.ne.s32.totalorder %s114, %s130
      %p132 = scmp.eq.s32.totalorder %s19, 0
      %p133 = por %p131, %p132
      %s134 = ssub.s32 %s20, %s32
      %s135 = ssub.s32 %s21, %s28
      %s136 = sor.u32 %s134, %s135
      %p137 = scmp.eq.s32.totalorder %s136, 0
      %s139 = sadd.s32 %s138, 1
      %s140 = scalar_select %p137, %s138, %s139
      %p143 = pneg %p137
      %p144 = scmp.eq.s32.totalorder %s13, 1
      %p145 = por %p143, %p144
      %p146 = scmp.ne.s32.totalorder %s138, %s141
      %p147 = scmp.eq.s32.totalorder %s13, 0
      %p148 = por %p146, %p147
      %p149 = scmp.ne.s32.totalorder %s138, %s141
      %p150 = scmp.eq.s32.totalorder %s18, 1
      %p151 = por %p149, %p150
      %p152 = scmp.ne.s32.totalorder %s141, %s142
      %p153 = scmp.eq.s32.totalorder %s18, 0
      %p154 = por %p152, %p153
      %p155 = scmp.ne.s32.totalorder %s141, %s142
      %p156 = scmp.eq.s32.totalorder %s19, 1
      %p157 = por %p155, %p156
      %p159 = scmp.ne.s32.totalorder %s142, %s158
      %p160 = scmp.eq.s32.totalorder %s19, 0
      %p161 = por %p159, %p160
      %p162 = scmp.le.s32.totalorder 1, %s13
      %p163 = scmp.lt.s32.totalorder %s13, 3
      %p164 = pnand %p162, %p163
      %p165 = pneg %p164
      // Predicated region
      $region9: #{tpu_custom_call.1} parent=5 // pred_check
        _
      $region10: #{tpu_custom_call.1} parent=5 // pred_check_branch
        %167 = sbr.rel (%p164) target = $region12
      $region11: #{tpu_custom_call.1} parent=5 // pred_region
        %s168 = ssub.s32 %s13, 1
        // Predicated region
        $region13: #{tpu_custom_call.1} parent=11 // pred_check
          %p169 = pneg %p51
        $region14: #{tpu_custom_call.1} parent=11 // pred_check_branch
          %171 = sbr.rel (%p169) target = $region16
        $region15: #{tpu_custom_call.1} parent=11 // pred_region
          %s172 = smul.u32 2, %s23
          %p173 = scmp.lt.s32.totalorder %s172, 1
          %s174 = scalar_select %p173, %s172, 1
          %s175 = smul.addr %s174, 2
          %s176 = scalar_lea.vmem %s0, %s175
          %s177 = smul.u32 2, %s23
        $region16: #{tpu_custom_call.1} parent=11 // pred_fallthru
          _
        // Predicated region
        $region17: #{tpu_custom_call.1} parent=11 // pred_check
          %p178 = pneg %p72
        $region18: #{tpu_custom_call.1} parent=11 // pred_check_branch
          %180 = sbr.rel (%p178) target = $region20
        $region19: #{tpu_custom_call.1} parent=11 // pred_region
          _
        $region20: #{tpu_custom_call.1} parent=11 // pred_fallthru
          _
      $region12: #{tpu_custom_call.1} parent=5 // pred_fallthru
        _
      %p181 = scmp.lt.s32.totalorder %s13, 2
      // Predicated region
      $region21: #{tpu_custom_call.1} parent=5 // pred_check
        %p182 = pneg %p181
      $region22: #{tpu_custom_call.1} parent=5 // pred_check_branch
        %184 = sbr.rel (%p182) target = $region24
      $region23: #{tpu_custom_call.1} parent=5 // pred_region
        // Predicated region
        $region25: #{tpu_custom_call.1} parent=23 // pred_check
          %p185 = pneg %p92
        $region26: #{tpu_custom_call.1} parent=23 // pred_check_branch
          %187 = sbr.rel (%p185) target = $region28
        $region27: #{tpu_custom_call.1} parent=23 // pred_region
          %p188 = scmp.lt.s32.totalorder %s20, 1
          %s189 = scalar_select %p188, %s20, 1
          %s190 = smul.addr %s189, 8
          %s191 = smul.addr %s190, 8
          %s192 = scalar_lea.vmem %s2, %s191
        $region28: #{tpu_custom_call.1} parent=23 // pred_fallthru
          _
        // Predicated region
        $region29: #{tpu_custom_call.1} parent=23 // pred_check
          %p193 = pneg %p120
        $region30: #{tpu_custom_call.1} parent=23 // pred_check_branch
          %195 = sbr.rel (%p193) target = $region32
        $region31: #{tpu_custom_call.1} parent=23 // pred_region
          %s196 = smul.u32 2, %s21
          %p197 = scmp.lt.s32.totalorder %s20, 1
          %s198 = scalar_select %p197, %s20, 1
          %p199 = scmp.lt.s32.totalorder %s196, 1
          %s200 = scalar_select %p199, %s196, 1
          %s201 = smul.addr %s198, 2
          %s202 = sadd.s32 %s200, %s201
          %s203 = smul.addr %s202, 2
          %s204 = scalar_lea.vmem %s3, %s203
          %s205 = smul.u32 2, %s21
        $region32: #{tpu_custom_call.1} parent=23 // pred_fallthru
          _
      $region24: #{tpu_custom_call.1} parent=5 // pred_fallthru
        _
      %p206 = scmp.le.s32.totalorder 1, %s13
      %p207 = scmp.lt.s32.totalorder %s13, 3
      %p208 = pnand %p206, %p207
      %p209 = pneg %p208
      // Predicated region
      $region33: #{tpu_custom_call.1} parent=5 // pred_check
        _
      $region34: #{tpu_custom_call.1} parent=5 // pred_check_branch
        %211 = sbr.rel (%p208) target = $region36
      $region35: #{tpu_custom_call.1} parent=5 // pred_region
        %s212 = ssub.s32 %s13, 1
        %s213 = smul.u32 2, %s23
        %p214 = scmp.lt.s32.totalorder %s213, 1
        %s215 = scalar_select %p214, %s213, 1
        %s216 = smul.addr %s215, 2
        %s217 = scalar_lea.vmem %s0, %s216
        %p218 = pneg %p51
        %p219 = pneg %p48
        %p220 = pneg %p72
        %p221 = pneg %p69
        %p222 = scmp.lt.s32.totalorder %s22, 1
        %s223 = scalar_select %p222, %s22, 1
        %s224 = smul.addr %s223, 8
        %s225 = smul.addr %s224, 8
        %s226 = scalar_lea.vmem %s2, %s225
        %p227 = pneg %p98
        %p228 = pneg %p95
        %s229 = smul.u32 2, %s23
        %p230 = scmp.lt.s32.totalorder %s22, 1
        %s231 = scalar_select %p230, %s22, 1
        %p232 = scmp.lt.s32.totalorder %s229, 1
        %s233 = scalar_select %p232, %s229, 1
        %s234 = smul.addr %s231, 2
        %s235 = sadd.s32 %s233, %s234
        %s236 = smul.addr %s235, 2
        %s237 = scalar_lea.vmem %s3, %s236
        %p238 = pneg %p126
        %p239 = pneg %p123
        %p240 = pneg %p154
        %p241 = pneg %p151
        %s242 = sand.u32 %s141, 1
        %s243 = scalar_lea.sflag [#allocation3], %s242
        %s244 = sand.u32 %s141, 1
        %s245 = smul.addr %s244, 8
        %s246 = scalar_lea.vmem [#allocation2], %s245
        %s247 = smul.u32 2, %s23
        %p248 = scmp.lt.s32.totalorder %s247, 1
        %s249 = scalar_select %p248, %s247, 1
        %s250 = smul.addr %s249, 2
        %s251 = scalar_lea.vmem %s0, %s250
        %s252 = smul.u32 2, %s23
        %p253 = scmp.lt.s32.totalorder %s22, 1
        %s254 = scalar_select %p253, %s22, 1
        %s255 = smul.addr %s254, 8
        %s256 = smul.addr %s255, 8
        %s257 = scalar_lea.vmem %s2, %s256
        %s258 = smul.u32 2, %s23
        %p259 = scmp.lt.s32.totalorder %s22, 1
        %s260 = scalar_select %p259, %s22, 1
        %p261 = scmp.lt.s32.totalorder %s258, 1
        %s262 = scalar_select %p261, %s258, 1
        %s263 = smul.addr %s260, 2
        %s264 = sadd.s32 %s262, %s263
        %s265 = smul.addr %s264, 2
        %s266 = scalar_lea.vmem %s3, %s265
        %s267 = smul.u32 2, %s23
        %s268 = smul.u32 2, %s23
        %v269 = vld [vmem:[%s266] sm:$0xf]
        %v270 = vld [vmem:[%s251] ss:$2 sm:$0x3]
        %s271 = scalar_lea.vmem %s251, 1
        %v272 = vld [vmem:[%s271] ss:$2 sm:$0x3]
        %v275 = vunpack.c.l.s4 1966171168
        %v276 = vunpack.c.0.s8 %v275
        %v277 = vlaneseq
        %v278 = vshrl.u32 %v277, 7
        %v279 = vsub.s32 %v276, %v278
        %v280 = vrot.slane %v269, %v279
        %v282 = vadd.f32 %v270, %v280
        %v283 = vsub.f32 %v282, 0.5
        %v284 = vcombine.high %v280, %v280
        %v286 = vadd.f32 %v272, %v284
        %v287 = vsub.f32 %v286, 0.5
        %v288 = vfloor.f32 %v283
        %v289 = vfloor.f32 %v287
        %v290 = vsub.f32 %v283, %v288
        %v291 = vsub.f32 %v287, %v289
        %v292 = vcvt.f32.s32.to.zero.pseudo %v288
        %v293 = vcvt.f32.s32.to.zero.pseudo %v289
        %v294 = vadd.s32 %v292, 1
        %v295 = vadd.s32 %v293, 1
        %v296 = vlaneseq
        %v297 = vshrl.u32 %v296, 7
        %v298 = vadd.s32 %v297, 8
        %v299 = vlaneseq
        %v300 = vshrl.u32 %v299, 7
        %v301 = vsub.s32 0, %v300
        %v302 = vrot.slane %v292, %v301
        %v303 = vlaneseq
        %v304 = vshrl.u32 %v303, 7
        %v305 = vsub.s32 1, %v304
        %v306 = vrot.slane %v292, %v305
        %vm307 = vcmp.eq.s32.totalorder %v297, %v302
        %vm308 = vcmp.eq.s32.totalorder %v297, %v306
        %vm309 = vcmp.eq.s32.totalorder %v298, %v302
        %vm310 = vcmp.eq.s32.totalorder %v298, %v306
        %v311 = vsub.f32 1.0, %v290
        %v312 = vlaneseq
        %v313 = vshrl.u32 %v312, 7
        %v314 = vsub.s32 0, %v313
        %v315 = vrot.slane %v294, %v314
        %v316 = vlaneseq
        %v317 = vshrl.u32 %v316, 7
        %v318 = vsub.s32 1, %v317
        %v319 = vrot.slane %v294, %v318
        %vm320 = vcmp.eq.s32.totalorder %v297, %v315
        %vm321 = vcmp.eq.s32.totalorder %v297, %v319
        %vm322 = vcmp.eq.s32.totalorder %v298, %v315
        %vm323 = vcmp.eq.s32.totalorder %v298, %v319
        %v325 = vlaneseq
        %v326 = vshrl.u32 %v325, 7
        %v327 = vsub.s32 0, %v326
        %v328 = vrot.slane %v290, %v327
        %v329 = vlaneseq
        %v330 = vshrl.u32 %v329, 7
        %v331 = vsub.s32 1, %v330
        %v332 = vrot.slane %v290, %v331
        %v335 = vsel %vm320, %v328, 0.0
        %v336 = vsel %vm321, %v332, 0.0
        %v337 = vsel %vm322, %v328, 0.0
        %v338 = vsel %vm323, %v332, 0.0
        %v340 = vlaneseq
        %v341 = vshrl.u32 %v340, 7
        %v342 = vsub.s32 0, %v341
        %v343 = vrot.slane %v311, %v342
        %v344 = vlaneseq
        %v345 = vshrl.u32 %v344, 7
        %v346 = vsub.s32 1, %v345
        %v347 = vrot.slane %v311, %v346
        %v350 = vsel %vm307, %v343, %v335
        %v351 = vsel %vm308, %v347, %v336
        %v352 = vsel %vm309, %v343, %v337
        %v353 = vsel %vm310, %v347, %v338
        %v354 = vlaneseq
        %v355 = vshrl.u32 %v354, 7
        %v356 = vsub.s32 0, %v355
        %v357 = vrot.slane %v293, %v356
        %v358 = vlaneseq
        %v359 = vshrl.u32 %v358, 7
        %v360 = vsub.s32 1, %v359
        %v361 = vrot.slane %v293, %v360
        %vm362 = vcmp.eq.s32.totalorder %v297, %v357
        %vm363 = vcmp.eq.s32.totalorder %v297, %v361
        %vm364 = vcmp.eq.s32.totalorder %v298, %v357
        %vm365 = vcmp.eq.s32.totalorder %v298, %v361
        %v366 = vsub.f32 1.0, %v291
        %v367 = vlaneseq
        %v368 = vshrl.u32 %v367, 7
        %v369 = vsub.s32 0, %v368
        %v370 = vrot.slane %v295, %v369
        %v371 = vlaneseq
        %v372 = vshrl.u32 %v371, 7
        %v373 = vsub.s32 1, %v372
        %v374 = vrot.slane %v295, %v373
        %vm375 = vcmp.eq.s32.totalorder %v297, %v370
        %vm376 = vcmp.eq.s32.totalorder %v297, %v374
        %vm377 = vcmp.eq.s32.totalorder %v298, %v370
        %vm378 = vcmp.eq.s32.totalorder %v298, %v374
        %v380 = vlaneseq
        %v381 = vshrl.u32 %v380, 7
        %v382 = vsub.s32 0, %v381
        %v383 = vrot.slane %v291, %v382
        %v384 = vlaneseq
        %v385 = vshrl.u32 %v384, 7
        %v386 = vsub.s32 1, %v385
        %v387 = vrot.slane %v291, %v386
        %v390 = vsel %vm375, %v383, 0.0
        %v391 = vsel %vm376, %v387, 0.0
        %v392 = vsel %vm377, %v383, 0.0
        %v393 = vsel %vm378, %v387, 0.0
        %v395 = vlaneseq
        %v396 = vshrl.u32 %v395, 7
        %v397 = vsub.s32 0, %v396
        %v398 = vrot.slane %v366, %v397
        %v399 = vlaneseq
        %v400 = vshrl.u32 %v399, 7
        %v401 = vsub.s32 1, %v400
        %v402 = vrot.slane %v366, %v401
        %v405 = vsel %vm362, %v398, %v390
        %v406 = vsel %vm363, %v402, %v391
        %v407 = vsel %vm364, %v398, %v392
        %v408 = vsel %vm365, %v402, %v393
        %v409 = vld [vmem:[%s257] sm:$0xff]
        %v410 = vld [vmem:[%s257 + $0x8] sm:$0xff]
        %v411 = vld [vmem:[%s257 + $0x10] sm:$0xff]
        %v412 = vld [vmem:[%s257 + $0x18] sm:$0xff]
        %v413 = vld [vmem:[%s257 + $0x20] sm:$0xff]
        %v414 = vld [vmem:[%s257 + $0x28] sm:$0xff]
        %v415 = vld [vmem:[%s257 + $0x30] sm:$0xff]
        %v416 = vld [vmem:[%s257 + $0x38] sm:$0xff]
        %vm417 = vcmask 130048
        %v419 = vsel %vm417, %v409, 0
        %v422 = vsel %vm417, %v410, 0
        %v425 = vsel %vm417, %v411, 0
        %v428 = vsel %vm417, %v412, 0
        %v431 = vsel %vm417, %v413, 0
        %v434 = vsel %vm417, %v414, 0
        %v437 = vsel %vm417, %v415, 0
        %v440 = vsel %vm417, %v416, 0
        %442 = vmatprep.subr.mxu0 %v351
        %443 = vmatpush1.msra.mxu0 %v350
        %444 = vmatprep.subr.mxu0 %v353
        %445 = vmatpush1.msra.mxu0 %v352
        %446 = vmatprep.subr.mxu0 0.0
        %447 = vmatpush1.msra.mxu0 0.0
        %448 = vmatprep.subr.mxu0 0.0
        %449 = vmatpush1.msra.mxu0 0.0
        %450 = vmatprep.subr.mxu0 0.0
        %451 = vmatpush1.msra.mxu0 0.0
        %452 = vmatprep.subr.mxu0 0.0
        %453 = vmatpush1.msra.mxu0 0.0
        %454 = vmatprep.subr.mxu0 0.0
        %455 = vmatpush1.msra.mxu0 0.0
        %456 = vmatprep.subr.mxu0 0.0
        %457 = vmatpush1.msra.mxu0 0.0
        %458 = vmatprep.subr.mxu0 0.0
        %459 = vmatpush1.msra.mxu0 0.0
        %460 = vmatprep.subr.mxu0 0.0
        %461 = vmatpush1.msra.mxu0 0.0
        %462 = vmatprep.subr.mxu0 0.0
        %463 = vmatpush1.msra.mxu0 0.0
        %464 = vmatprep.subr.mxu0 0.0
        %465 = vmatpush1.msra.mxu0 0.0
        %466 = vmatprep.subr.mxu0 0.0
        %467 = vmatpush1.msra.mxu0 0.0
        %468 = vmatprep.subr.mxu0 0.0
        %469 = vmatpush1.msra.mxu0 0.0
        %470 = vmatprep.subr.mxu0 0.0
        %471 = vmatpush1.msra.mxu0 0.0
        %472 = vmatprep.subr.mxu0 0.0
        %473 = vmatpush1.msra.mxu0 0.0
        %474 = vmatprep.subr.mxu0 0.0
        %475 = vmatpush1.msra.mxu0 0.0
        %476 = vmatprep.subr.mxu0 0.0
        %477 = vmatpush1.msra.mxu0 0.0
        %478 = vmatprep.subr.mxu0 0.0
        %479 = vmatpush1.msra.mxu0 0.0
        %480 = vmatprep.subr.mxu0 0.0
        %481 = vmatpush1.msra.mxu0 0.0
        %482 = vmatprep.subr.mxu0 0.0
        %483 = vmatpush1.msra.mxu0 0.0
        %484 = vmatprep.subr.mxu0 0.0
        %485 = vmatpush1.msra.mxu0 0.0
        %486 = vmatprep.subr.mxu0 0.0
        %487 = vmatpush1.msra.mxu0 0.0
        %488 = vmatprep.subr.mxu0 0.0
        %489 = vmatpush1.msra.mxu0 0.0
        %490 = vmatprep.subr.mxu0 0.0
        %491 = vmatpush1.msra.mxu0 0.0
        %492 = vmatprep.subr.mxu0 0.0
        %493 = vmatpush1.msra.mxu0 0.0
        %494 = vmatprep.subr.mxu0 0.0
        %495 = vmatpush1.msra.mxu0 0.0
        %496 = vmatprep.subr.mxu0 0.0
        %497 = vmatpush1.msra.mxu0 0.0
        %498 = vmatprep.subr.mxu0 0.0
        %499 = vmatpush1.msra.mxu0 0.0
        %500 = vmatprep.subr.mxu0 0.0
        %501 = vmatpush1.msra.mxu0 0.0
        %502 = vmatprep.subr.mxu0 0.0
        %503 = vmatpush1.msra.mxu0 0.0
        %504 = vmatprep.subr.mxu0 0.0
        %505 = vmatpush1.msra.mxu0 0.0
        %506 = vmatprep.mubr.f32.mxu0 0.0
        %507 = vmatmul.mubr.f32.gmra.mrb[0].mxu0 %v419
        %v508 = vpop.f32.mrb[0].mxu0
        %v509 = vadd.f32 0.0, %v508
        %v510 = vpop.f32.mrb[0].mxu0
        %v511 = vadd.f32 0.0, %v510
        %512 = vmatprep.mubr.f32.mxu0 0.0
        %513 = vmatmul.mubr.f32.gmra.mrb[0].mxu0 %v422
        %v514 = vpop.f32.mrb[0].mxu0
        %v515 = vadd.f32 0.0, %v514
        %v516 = vpop.f32.mrb[0].mxu0
        %v517 = vadd.f32 0.0, %v516
        %518 = vmatprep.mubr.f32.mxu0 0.0
        %519 = vmatmul.mubr.f32.gmra.mrb[0].mxu0 %v425
        %v520 = vpop.f32.mrb[0].mxu0
        %v521 = vadd.f32 0.0, %v520
        %v522 = vpop.f32.mrb[0].mxu0
        %v523 = vadd.f32 0.0, %v522
        %524 = vmatprep.mubr.f32.mxu0 0.0
        %525 = vmatmul.mubr.f32.gmra.mrb[0].mxu0 %v428
        %v526 = vpop.f32.mrb[0].mxu0
        %v527 = vadd.f32 0.0, %v526
        %v528 = vpop.f32.mrb[0].mxu0
        %v529 = vadd.f32 0.0, %v528
        %530 = vmatprep.mubr.f32.mxu0 0.0
        %531 = vmatmul.mubr.f32.gmra.mrb[0].mxu0 %v431
        %v532 = vpop.f32.mrb[0].mxu0
        %v533 = vadd.f32 0.0, %v532
        %v534 = vpop.f32.mrb[0].mxu0
        %v535 = vadd.f32 0.0, %v534
        %536 = vmatprep.mubr.f32.mxu0 0.0
        %537 = vmatmul.mubr.f32.gmra.mrb[0].mxu0 %v434
        %v538 = vpop.f32.mrb[0].mxu0
        %v539 = vadd.f32 0.0, %v538
        %v540 = vpop.f32.mrb[0].mxu0
        %v541 = vadd.f32 0.0, %v540
        %542 = vmatprep.mubr.f32.mxu0 0.0
        %543 = vmatmul.mubr.f32.gmra.mrb[0].mxu0 %v437
        %v544 = vpop.f32.mrb[0].mxu0
        %v545 = vadd.f32 0.0, %v544
        %v546 = vpop.f32.mrb[0].mxu0
        %v547 = vadd.f32 0.0, %v546
        %548 = vmatprep.mubr.f32.mxu0 0.0
        %549 = vmatmul.mubr.f32.gmra.mrb[0].mxu0 %v440
        %v550 = vpop.f32.mrb[0].mxu0
        %v551 = vadd.f32 0.0, %v550
        %v552 = vpop.f32.mrb[0].mxu0
        %v553 = vadd.f32 0.0, %v552
        %554 = vdwg.mxu0
        %v555 = vmul.f32 %v509, %v405
        %v556 = vmul.f32 %v511, %v406
        %v557 = vmul.f32 %v515, %v407
        %v558 = vmul.f32 %v517, %v408
        %v559 = vmul.f32 %v521, %v405
        %v560 = vmul.f32 %v523, %v406
        %v561 = vmul.f32 %v527, %v407
        %v562 = vmul.f32 %v529, %v408
        %v563 = vmul.f32 %v533, %v405
        %v564 = vmul.f32 %v535, %v406
        %v565 = vmul.f32 %v539, %v407
        %v566 = vmul.f32 %v541, %v408
        %v567 = vmul.f32 %v545, %v405
        %v568 = vmul.f32 %v547, %v406
        %v569 = vmul.f32 %v551, %v407
        %v570 = vmul.f32 %v553, %v408
        %v571 = vld [vmem:[%s1] sm:$0xf]
        %vm572 = vcmask 523264
        %v574 = vsel %vm572, %v571, 0
        %576 = vmatprep.subr.mxu0 %v556
        %577 = vmatpush1.msra.mxu0 %v555
        %578 = vmatprep.subr.mxu0 %v558
        %579 = vmatpush1.msra.mxu0 %v557
        %580 = vmatprep.subr.mxu0 %v560
        %581 = vmatpush1.msra.mxu0 %v559
        %582 = vmatprep.subr.mxu0 %v562
        %583 = vmatpush1.msra.mxu0 %v561
        %584 = vmatprep.subr.mxu0 %v564
        %585 = vmatpush1.msra.mxu0 %v563
        %586 = vmatprep.subr.mxu0 %v566
        %587 = vmatpush1.msra.mxu0 %v565
        %588 = vmatprep.subr.mxu0 %v568
        %589 = vmatpush1.msra.mxu0 %v567
        %590 = vmatprep.subr.mxu0 %v570
        %591 = vmatpush1.msra.mxu0 %v569
        %592 = vmatprep.subr.mxu0 0.0
        %593 = vmatpush1.msra.mxu0 0.0
        %594 = vmatprep.subr.mxu0 0.0
        %595 = vmatpush1.msra.mxu0 0.0
        %596 = vmatprep.subr.mxu0 0.0
        %597 = vmatpush1.msra.mxu0 0.0
        %598 = vmatprep.subr.mxu0 0.0
        %599 = vmatpush1.msra.mxu0 0.0
        %600 = vmatprep.subr.mxu0 0.0
        %601 = vmatpush1.msra.mxu0 0.0
        %602 = vmatprep.subr.mxu0 0.0
        %603 = vmatpush1.msra.mxu0 0.0
        %604 = vmatprep.subr.mxu0 0.0
        %605 = vmatpush1.msra.mxu0 0.0
        %606 = vmatprep.subr.mxu0 0.0
        %607 = vmatpush1.msra.mxu0 0.0
        %608 = vmatprep.subr.mxu0 0.0
        %609 = vmatpush1.msra.mxu0 0.0
        %610 = vmatprep.subr.mxu0 0.0
        %611 = vmatpush1.msra.mxu0 0.0
        %612 = vmatprep.subr.mxu0 0.0
        %613 = vmatpush1.msra.mxu0 0.0
        %614 = vmatprep.subr.mxu0 0.0
        %615 = vmatpush1.msra.mxu0 0.0
        %616 = vmatprep.subr.mxu0 0.0
        %617 = vmatpush1.msra.mxu0 0.0
        %618 = vmatprep.subr.mxu0 0.0
        %619 = vmatpush1.msra.mxu0 0.0
        %620 = vmatprep.subr.mxu0 0.0
        %621 = vmatpush1.msra.mxu0 0.0
        %622 = vmatprep.subr.mxu0 0.0
        %623 = vmatpush1.msra.mxu0 0.0
        %624 = vmatprep.subr.mxu0 0.0
        %625 = vmatpush1.msra.mxu0 0.0
        %626 = vmatprep.subr.mxu0 0.0
        %627 = vmatpush1.msra.mxu0 0.0
        %628 = vmatprep.subr.mxu0 0.0
        %629 = vmatpush1.msra.mxu0 0.0
        %630 = vmatprep.subr.mxu0 0.0
        %631 = vmatpush1.msra.mxu0 0.0
        %632 = vmatprep.subr.mxu0 0.0
        %633 = vmatpush1.msra.mxu0 0.0
        %634 = vmatprep.subr.mxu0 0.0
        %635 = vmatpush1.msra.mxu0 0.0
        %636 = vmatprep.subr.mxu0 0.0
        %637 = vmatpush1.msra.mxu0 0.0
        %638 = vmatprep.subr.mxu0 0.0
        %639 = vmatpush1.msra.mxu0 0.0
        %640 = vmatprep.mubr.f32.mxu0 0.0
        %641 = vmatmul.mubr.f32.gmra.mrb[0].mxu0 %v574
        %v642 = vpop.f32.mrb[0].mxu0
        %v643 = vadd.f32 0.0, %v642
        %v644 = vpop.f32.mrb[0].mxu0
        %v645 = vadd.f32 0.0, %v644
        %646 = vdwg.mxu0
        %v649 = vcombine.low %v643, %v645
        %651 = vst [vmem:[%s246] sm:$0xff] %v649
        %s652 = sand.u32 %s141, 1
        %s653 = scalar_lea.sflag [#allocation3], %s652
        %s654 = sand.u32 %s141, 1
        %s655 = smul.addr %s654, 8
        %s656 = scalar_lea.vmem [#allocation2], %s655
        // Predicated region
        $region37: #{tpu_custom_call.1} parent=35 // pred_check
          %p657 = pneg %p151
        $region38: #{tpu_custom_call.1} parent=35 // pred_check_branch
          %659 = sbr.rel (%p657) target = $region40
        $region39: #{tpu_custom_call.1} parent=35 // pred_region
          %s660 = smul.u32 2, %s23
          %s662 = ssub.s32 128, 128
          %663 = vsyncadd %s653, %s662
          %s664 = smul.addr %s22, 2
          %s665 = sadd.s32 %s660, %s664
          %s666 = smul.addr %s665, 64
          %s667 = scalar_lea.hbm %s4, %s666
          %s669 = sshll.u32 %s656, 4
          %s670 = int_to_ptr.vmem [resolvable:$true] %s669
          %672 = dma.vmem_to_hbm [thread:$0]  %s670, 128, %s667, %s653
        $region40: #{tpu_custom_call.1} parent=35 // pred_fallthru
          _
      $region36: #{tpu_custom_call.1} parent=5 // pred_fallthru
        _
      %p673 = scmp.le.s32.totalorder 2, %s13
      // Predicated region
      $region41: #{tpu_custom_call.1} parent=5 // pred_check
        %p674 = pneg %p673
      $region42: #{tpu_custom_call.1} parent=5 // pred_check_branch
        %676 = sbr.rel (%p674) target = $region44
      $region43: #{tpu_custom_call.1} parent=5 // pred_region
        %s677 = ssub.s32 %s13, 2
        // Predicated region
        $region45: #{tpu_custom_call.1} parent=43 // pred_check
          %p678 = pneg %p157
        $region46: #{tpu_custom_call.1} parent=43 // pred_check_branch
          %680 = sbr.rel (%p678) target = $region48
        $region47: #{tpu_custom_call.1} parent=43 // pred_region
          %s681 = sand.u32 %s142, 1
          %s682 = scalar_lea.sflag [#allocation3], %s681
          %s683 = sand.u32 %s142, 1
          %s684 = smul.addr %s683, 8
          %s685 = scalar_lea.vmem [#allocation2], %s684
          %686 = dma.done %s682, 128
        $region48: #{tpu_custom_call.1} parent=43 // pred_fallthru
          _
      $region44: #{tpu_custom_call.1} parent=5 // pred_fallthru
        _
    $region6: #{tpu_custom_call.1} parent=1 // loop_footer
      %s17 = sadd.s32 1, %s13
    $region7: #{tpu_custom_call.1} parent=1 // loop_footer_branch
      %12 = sbr.rel target = $region3
    $region8: #{tpu_custom_call.1} parent=1 // loop_exit
      _
    %687 = vsyncpa [#allocation3], 1
    %s688 = scalar_lea.sflag [#allocation3], 1
    %689 = vsyncpa %s688, 1

</llo_original>
